<compile_context>
chip_gen: v7x
topology: tpu7x:2x2x1
jax: 0.10.0
libtpu: 0.0.40
codegen_flags: <defaults>
</compile_context>

<pallas_src>
import jax
import jax.numpy as jnp
from jax.experimental import pallas as pl
from jax.experimental.pallas import tpu as pltpu


def _laplace_kernel(x_ref, o_ref):
    # x_ref / o_ref: (TN, H, W) block of independent image planes in VMEM.
    x = x_ref[...]
    _, H, W = x.shape

    # 3x3 cross stencil via XLU rotates (separate issue slot from the VPU).
    # Rolls wrap around each plane's edges; the wrap is corrected below on the
    # four thin boundary slabs only (no full-array masking).
    up = pltpu.roll(x, shift=1, axis=1)          # x[i-1, j]   (row 0 wraps)
    down = pltpu.roll(x, shift=H - 1, axis=1)    # x[i+1, j]   (row H-1 wraps)
    left = pltpu.roll(x, shift=1, axis=2)        # x[i, j-1]   (col 0 wraps)
    right = pltpu.roll(x, shift=W - 1, axis=2)   # x[i, j+1]   (col W-1 wraps)

    # out = x - conv(x, laplace) = 5*x - (up + down + left + right)
    o_ref[...] = 5.0 * x - (up + down + left + right)

    # Boundary fixups: zero padding means the wrapped neighbour should not have
    # been subtracted -> add it back on the edge rows / columns. Corner cells
    # get both a row and a column correction, which is exactly what zero
    # padding requires.
    o_ref[:, pl.ds(0, 1), :] = (
        o_ref[:, pl.ds(0, 1), :] + x_ref[:, pl.ds(H - 1, 1), :])
    o_ref[:, pl.ds(H - 1, 1), :] = (
        o_ref[:, pl.ds(H - 1, 1), :] + x_ref[:, pl.ds(0, 1), :])
    o_ref[:, :, pl.ds(0, 1)] = (
        o_ref[:, :, pl.ds(0, 1)] + x_ref[:, :, pl.ds(W - 1, 1)])
    o_ref[:, :, pl.ds(W - 1, 1)] = (
        o_ref[:, :, pl.ds(W - 1, 1)] + x_ref[:, :, pl.ds(0, 1)])


def laplace_algorithm(image):
    """image: (N, C=1, H, W) -> image - conv2d(image, laplace_3x3, padding=1)."""
    N, C, H, W = image.shape
    assert C == 1, "reference conv weight is (1,1,3,3) -> single input channel"
    assert H >= 2 and W >= 2

    P = N * C
    x = image.reshape(P, H, W)

    bpe = jnp.dtype(image.dtype).itemsize
    plane_bytes = H * W * bpe

    # VMEM for pipelined blocks = 2 buffers x (in + out) x TN * plane_bytes.
    # Keep that under ~4 MiB so blocks + rolled intermediates fit comfortably
    # inside every generation's scoped VMEM (incl. v5e's 16 MiB default).
    tn = max(1, (4 * 1024 * 1024) // (4 * plane_bytes))
    tn = min(tn, P)
    # Keep >= 2 grid steps when possible so both v7x TensorCores get work.
    tn = min(tn, max(1, pl.cdiv(P, 2)))

    grid = pl.cdiv(P, tn)
    p_pad = grid * tn
    if p_pad != P:
        x = jnp.pad(x, ((0, p_pad - P), (0, 0), (0, 0)))

    spec = pl.BlockSpec((tn, H, W), lambda p: (p, 0, 0))
    vmem_limit = int(min(60 * 1024 * 1024,
                         max(32 * 1024 * 1024, 10 * tn * plane_bytes)))

    # TODO(synk): for very large planes (e.g. 2048^2 f32) tile H with a 1-row
    # halo instead of taking the full plane per block; for W << 128, pack
    # several planes along the lane axis for lane-dense stores.
    out = pl.pallas_call(
        _laplace_kernel,
        out_shape=jax.ShapeDtypeStruct((p_pad, H, W), image.dtype),
        grid_spec=pltpu.PrefetchScalarGridSpec(
            num_scalar_prefetch=0,
            grid=(grid,),
            in_specs=[spec],
            out_specs=spec,
        ),
        compiler_params=pltpu.CompilerParams(
            dimension_semantics=("parallel",),
            vmem_limit_bytes=vmem_limit,
        ),
    )(x)

    return out[:P].reshape(N, C, H, W)


def _laplace_reference(image):
    """Pure-JAX reference (matches F.conv2d(..., padding=1) semantics)."""
    x = image
    xp = jnp.pad(x, ((0, 0), (0, 0), (1, 1), (1, 1)))
    up = xp[:, :, :-2, 1:-1]
    down = xp[:, :, 2:, 1:-1]
    left = xp[:, :, 1:-1, :-2]
    right = xp[:, :, 1:-1, 2:]
    conv = up + down + left + right - 4.0 * x
    return x - conv


if __name__ == "__main__":
    k1, k2 = jax.random.split(jax.random.PRNGKey(0))

    # Primary small test (module's (1,1,3,3) conv weight implies C=1 NCHW).
    x1 = jax.random.normal(k1, (2, 1, 16, 16), dtype=jnp.float32)
    out1 = jax.block_until_ready(laplace_algorithm(x1))
    ref1 = _laplace_reference(x1)
    assert out1.shape == x1.shape and out1.dtype == x1.dtype
    assert jnp.allclose(out1, ref1, atol=1e-5, rtol=1e-5)

    # Second shape: exercises the plane-batching + N-padding path and a
    # lane-full (W=128) plane.
    x2 = jax.random.normal(k2, (5, 1, 8, 128), dtype=jnp.float32)
    out2 = jax.block_until_ready(laplace_algorithm(x2))
    ref2 = _laplace_reference(x2)
    assert out2.shape == x2.shape and out2.dtype == x2.dtype
    assert jnp.allclose(out2, ref2, atol=1e-5, rtol=1e-5)

    print("KERNEL_OK")
</pallas_src>

<mosaic_0001>
module attributes {stable_mosaic.version = 11 : i64} {
  func.func @_laplace_kernel(%arg0: i32, %arg1: memref<1x16x16xf32, #tpu.memory_space<vmem>>, %arg2: memref<1x16x16xf32, #tpu.memory_space<vmem>>) attributes {dimension_semantics = [#tpu.dimension_semantics<parallel>], iteration_bounds = array<i64: 2>, scalar_prefetch = 0 : i64, scratch_operands = 0 : i64, tpu.core_type = #tpu.core_type<tc>, window_params = [{transform_indices = @transform_0, window_bounds = array<i64: 1, 16, 16>}, {transform_indices = @transform_1, window_bounds = array<i64: 1, 16, 16>}]} {
    %c0 = arith.constant 0 : index
    %c0_0 = arith.constant 0 : index
    %c0_1 = arith.constant 0 : index
    %0 = vector.load %arg1[%c0, %c0_0, %c0_1] : memref<1x16x16xf32, #tpu.memory_space<vmem>>, vector<1x16x16xf32>
    %c1_i32 = arith.constant 1 : i32
    %1 = tpu.dynamic_rotate %0 by %c1_i32 dim 1 : vector<1x16x16xf32>, i32 -> vector<1x16x16xf32>
    %c15_i32 = arith.constant 15 : i32
    %2 = tpu.dynamic_rotate %0 by %c15_i32 dim 1 : vector<1x16x16xf32>, i32 -> vector<1x16x16xf32>
    %c1_i32_2 = arith.constant 1 : i32
    %3 = tpu.dynamic_rotate %0 by %c1_i32_2 dim 2 : vector<1x16x16xf32>, i32 -> vector<1x16x16xf32>
    %c15_i32_3 = arith.constant 15 : i32
    %4 = tpu.dynamic_rotate %0 by %c15_i32_3 dim 2 : vector<1x16x16xf32>, i32 -> vector<1x16x16xf32>
    %cst = arith.constant 5.000000e+00 : f32
    %5 = vector.broadcast %cst : f32 to vector<1x16x16xf32>
    %6 = arith.mulf %5, %0 : vector<1x16x16xf32>
    %7 = arith.addf %1, %2 : vector<1x16x16xf32>
    %8 = arith.addf %7, %3 : vector<1x16x16xf32>
    %9 = arith.addf %8, %4 : vector<1x16x16xf32>
    %10 = arith.subf %6, %9 : vector<1x16x16xf32>
    %c0_4 = arith.constant 0 : index
    %c0_5 = arith.constant 0 : index
    %c0_6 = arith.constant 0 : index
    %11 = vector.load %arg2[%c0_4, %c0_5, %c0_6] : memref<1x16x16xf32, #tpu.memory_space<vmem>>, vector<1x16x16xf32>
    tpu.vector_store %arg2[%c0_4, %c0_5, %c0_6], %10 {strides = array<i32>} : memref<1x16x16xf32, #tpu.memory_space<vmem>>, vector<1x16x16xf32>,
    %c0_7 = arith.constant 0 : index
    %c0_8 = arith.constant 0 : index
    %c0_9 = arith.constant 0 : index
    %12 = vector.load %arg2[%c0_7, %c0_8, %c0_9] : memref<1x16x16xf32, #tpu.memory_space<vmem>>, vector<1x1x16xf32>
    %c0_10 = arith.constant 0 : index
    %c15 = arith.constant 15 : index
    %c0_11 = arith.constant 0 : index
    %13 = vector.load %arg1[%c0_10, %c15, %c0_11] : memref<1x16x16xf32, #tpu.memory_space<vmem>>, vector<1x1x16xf32>
    %14 = arith.addf %12, %13 : vector<1x1x16xf32>
    %c0_12 = arith.constant 0 : index
    %c0_13 = arith.constant 0 : index
    %c0_14 = arith.constant 0 : index
    %15 = vector.load %arg2[%c0_12, %c0_13, %c0_14] : memref<1x16x16xf32, #tpu.memory_space<vmem>>, vector<1x1x16xf32>
    tpu.vector_store %arg2[%c0_12, %c0_13, %c0_14], %14 {strides = array<i32>} : memref<1x16x16xf32, #tpu.memory_space<vmem>>, vector<1x1x16xf32>,
    %c0_15 = arith.constant 0 : index
    %c15_16 = arith.constant 15 : index
    %c0_17 = arith.constant 0 : index
    %16 = vector.load %arg2[%c0_15, %c15_16, %c0_17] : memref<1x16x16xf32, #tpu.memory_space<vmem>>, vector<1x1x16xf32>
    %c0_18 = arith.constant 0 : index
    %c0_19 = arith.constant 0 : index
    %c0_20 = arith.constant 0 : index
    %17 = vector.load %arg1[%c0_18, %c0_19, %c0_20] : memref<1x16x16xf32, #tpu.memory_space<vmem>>, vector<1x1x16xf32>
    %18 = arith.addf %16, %17 : vector<1x1x16xf32>
    %c0_21 = arith.constant 0 : index
    %c15_22 = arith.constant 15 : index
    %c0_23 = arith.constant 0 : index
    %19 = vector.load %arg2[%c0_21, %c15_22, %c0_23] : memref<1x16x16xf32, #tpu.memory_space<vmem>>, vector<1x1x16xf32>
    tpu.vector_store %arg2[%c0_21, %c15_22, %c0_23], %18 {strides = array<i32>} : memref<1x16x16xf32, #tpu.memory_space<vmem>>, vector<1x1x16xf32>,
    %c0_24 = arith.constant 0 : index
    %c0_25 = arith.constant 0 : index
    %c0_26 = arith.constant 0 : index
    %20 = vector.load %arg2[%c0_24, %c0_25, %c0_26] : memref<1x16x16xf32, #tpu.memory_space<vmem>>, vector<1x16x1xf32>
    %c0_27 = arith.constant 0 : index
    %c0_28 = arith.constant 0 : index
    %c15_29 = arith.constant 15 : index
    %21 = vector.load %arg1[%c0_27, %c0_28, %c15_29] : memref<1x16x16xf32, #tpu.memory_space<vmem>>, vector<1x16x1xf32>
    %22 = arith.addf %20, %21 : vector<1x16x1xf32>
    %c0_30 = arith.constant 0 : index
    %c0_31 = arith.constant 0 : index
    %c0_32 = arith.constant 0 : index
    %23 = vector.load %arg2[%c0_30, %c0_31, %c0_32] : memref<1x16x16xf32, #tpu.memory_space<vmem>>, vector<1x16x1xf32>
    tpu.vector_store %arg2[%c0_30, %c0_31, %c0_32], %22 {strides = array<i32>} : memref<1x16x16xf32, #tpu.memory_space<vmem>>, vector<1x16x1xf32>,
    %c0_33 = arith.constant 0 : index
    %c0_34 = arith.constant 0 : index
    %c15_35 = arith.constant 15 : index
    %24 = vector.load %arg2[%c0_33, %c0_34, %c15_35] : memref<1x16x16xf32, #tpu.memory_space<vmem>>, vector<1x16x1xf32>
    %c0_36 = arith.constant 0 : index
    %c0_37 = arith.constant 0 : index
    %c0_38 = arith.constant 0 : index
    %25 = vector.load %arg1[%c0_36, %c0_37, %c0_38] : memref<1x16x16xf32, #tpu.memory_space<vmem>>, vector<1x16x1xf32>
    %26 = arith.addf %24, %25 : vector<1x16x1xf32>
    %c0_39 = arith.constant 0 : index
    %c0_40 = arith.constant 0 : index
    %c15_41 = arith.constant 15 : index
    %27 = vector.load %arg2[%c0_39, %c0_40, %c15_41] : memref<1x16x16xf32, #tpu.memory_space<vmem>>, vector<1x16x1xf32>
    tpu.vector_store %arg2[%c0_39, %c0_40, %c15_41], %26 {strides = array<i32>} : memref<1x16x16xf32, #tpu.memory_space<vmem>>, vector<1x16x1xf32>,
    return
  }
  func.func @transform_0(%arg0: i32) -> (i32, i32, i32) {
    %c0_i32 = arith.constant 0 : i32
    %c0_i32_0 = arith.constant 0 : i32
    %c0_i32_1 = arith.constant 0 : i32
    return %arg0, %c0_i32, %c0_i32_0 : i32, i32, i32
  }
  func.func @transform_1(%arg0: i32) -> (i32, i32, i32) {
    %c0_i32 = arith.constant 0 : i32
    %c0_i32_0 = arith.constant 0 : i32
    %c0_i32_1 = arith.constant 0 : i32
    return %arg0, %c0_i32, %c0_i32_0 : i32, i32, i32
  }
}

</mosaic_0001>

<llo_original>
// kernel: tpu_custom_call.1
$region0: #{tpu_custom_call.1}
  #allocation0 [shape = 'u32[]', space=smem, size = 0x4, offset = 0x4, fixed_abs, tag = 'smem constant byte address 0x4 - core index']
  #allocation1 [shape = 'u32[144,128]{1,0:T(1,128)}', space=vmem, size = 0x12000, scoped, tag = 'internal scratch']
  %s0 = inlined_call_operand.hbm [shape: f32[2,16,16], index: 0, kind: input, shape index: {}]
  %s1 = inlined_call_operand.hbm [shape: f32[2,16,16], index: 1, kind: output, shape index: {}]
  %s2 = sld [smem:[#allocation0]]
  $region41: #{tpu_custom_call.1} parent=0
    _
  %s4 = ssub.s32 1, %s2
  %s5 = scalar_select 0, %s4, %s2
  $region1: #{tpu_custom_call.1} parent=0
    #allocation2 [shape = 'u8[16384]{0}', space=vmem, size = 0x4000, scoped, tag = 'input window, operand 0']
    #allocation3 [shape = 's32[2]{0}', space=sflag, size = 0x8, scoped, tag = 'scoped memory for tpu_custom_call.1']
    #allocation4 [shape = 's32[2]{0}', space=sflag, size = 0x8, scoped, tag = 'scoped memory for tpu_custom_call.1']
    #allocation5 [shape = 'u8[16384]{0}', space=vmem, size = 0x4000, scoped, tag = 'output window, operand 0']
    %6 = vsyncpa [#allocation3], 0
    %s7 = scalar_lea.sflag [#allocation3], 1
    %8 = vsyncpa %s7, 0
    %9 = vsyncpa [#allocation4], 0
    %s10 = scalar_lea.sflag [#allocation4], 1
    %11 = vsyncpa %s10, 0
    loop: start=0, step=1, limit=4
    $region2: #{tpu_custom_call.1} parent=1 // loop_pre_header
      _
    $region3: #{tpu_custom_call.1} parent=1 // loop_header
      %s13 = sphi 0, %s17
      %p14 = scmp.ge.s32.totalorder %s13, 4
      %s23 = sphi 0, %s25
      %s26 = sphi 0, %s23
      %s27 = sphi 0, %s26
      %s43 = sphi 0, %s27
      %s49 = sphi 0, %s51
      %s52 = sphi 0, %s49
      %s53 = sphi 0, %s52
      %s69 = sphi 0, %s53
    $region4: #{tpu_custom_call.1} parent=1 // loop_header_branch
      %16 = sbr.rel (%p14) target = $region8
    $region5: #{tpu_custom_call.1} parent=1 // loop_body
      %s18 = ssub.s32 %s13, 1
      %s19 = ssub.s32 %s13, 2
      %s20 = sadd.s32 %s13, 1
      %s21 = ssub.s32 %s13, %s20
      %p22 = scmp.eq.s32.totalorder %s21, 0
      %s24 = sadd.s32 %s23, 1
      %s25 = scalar_select %p22, %s23, %s24
      %p28 = pneg %p22
      %p29 = scmp.eq.s32.totalorder %s13, 1
      %p30 = por %p28, %p29
      %p31 = scmp.ne.s32.totalorder %s23, %s26
      %p32 = scmp.eq.s32.totalorder %s13, 0
      %p33 = por %p31, %p32
      %p34 = scmp.ne.s32.totalorder %s23, %s26
      %p35 = scmp.eq.s32.totalorder %s18, 1
      %p36 = por %p34, %p35
      %p37 = scmp.ne.s32.totalorder %s26, %s27
      %p38 = scmp.eq.s32.totalorder %s18, 0
      %p39 = por %p37, %p38
      %p40 = scmp.ne.s32.totalorder %s26, %s27
      %p41 = scmp.eq.s32.totalorder %s19, 1
      %p42 = por %p40, %p41
      %p44 = scmp.ne.s32.totalorder %s27, %s43
      %p45 = scmp.eq.s32.totalorder %s19, 0
      %p46 = por %p44, %p45
      %s47 = ssub.s32 %s13, %s20
      %p48 = scmp.eq.s32.totalorder %s47, 0
      %s50 = sadd.s32 %s49, 1
      %s51 = scalar_select %p48, %s49, %s50
      %p54 = pneg %p48
      %p55 = scmp.eq.s32.totalorder %s13, 1
      %p56 = por %p54, %p55
      %p57 = scmp.ne.s32.totalorder %s49, %s52
      %p58 = scmp.eq.s32.totalorder %s13, 0
      %p59 = por %p57, %p58
      %p60 = scmp.ne.s32.totalorder %s49, %s52
      %p61 = scmp.eq.s32.totalorder %s18, 1
      %p62 = por %p60, %p61
      %p63 = scmp.ne.s32.totalorder %s52, %s53
      %p64 = scmp.eq.s32.totalorder %s18, 0
      %p65 = por %p63, %p64
      %p66 = scmp.ne.s32.totalorder %s52, %s53
      %p67 = scmp.eq.s32.totalorder %s19, 1
      %p68 = por %p66, %p67
      %p70 = scmp.ne.s32.totalorder %s53, %s69
      %p71 = scmp.eq.s32.totalorder %s19, 0
      %p72 = por %p70, %p71
      %p73 = scmp.le.s32.totalorder 1, %s13
      %p74 = scmp.lt.s32.totalorder %s13, 3
      %p75 = pnand %p73, %p74
      %p76 = pneg %p75
      // Predicated region
      $region9: #{tpu_custom_call.1} parent=5 // pred_check
        _
      $region10: #{tpu_custom_call.1} parent=5 // pred_check_branch
        %78 = sbr.rel (%p75) target = $region12
      $region11: #{tpu_custom_call.1} parent=5 // pred_region
        %s79 = ssub.s32 %s13, 1
      $region12: #{tpu_custom_call.1} parent=5 // pred_fallthru
        _
      %p80 = scmp.lt.s32.totalorder %s13, 2
      // Predicated region
      $region13: #{tpu_custom_call.1} parent=5 // pred_check
        %p81 = pneg %p80
      $region14: #{tpu_custom_call.1} parent=5 // pred_check_branch
        %83 = sbr.rel (%p81) target = $region16
      $region15: #{tpu_custom_call.1} parent=5 // pred_region
        // Predicated region
        $region17: #{tpu_custom_call.1} parent=15 // pred_check
          %p84 = pneg %p33
        $region18: #{tpu_custom_call.1} parent=15 // pred_check_branch
          %86 = sbr.rel (%p84) target = $region20
        $region19: #{tpu_custom_call.1} parent=15 // pred_region
          %s87 = sand.u32 %s23, 1
          %s88 = scalar_lea.sflag [#allocation3], %s87
          %s89 = sand.u32 %s23, 1
          %s90 = smul.addr %s89, 16
          %s91 = scalar_lea.vmem [#allocation2], %s90
          %s93 = ssub.s32 256, 256
          %94 = vsyncadd %s88, %s93
          %s95 = smul.addr %s13, 2
          %s96 = smul.addr %s95, 128
          %s97 = scalar_lea.hbm %s0, %s96
          %s98 = sshll.u32 %s91, 4
          %s99 = int_to_ptr.vmem [resolvable:$true] %s98
          %104 = dma.hbm_to_vmem [thread:$0]  %s97, 256, %s99, %s88, 128, 128, 8
        $region20: #{tpu_custom_call.1} parent=15 // pred_fallthru
          _
      $region16: #{tpu_custom_call.1} parent=5 // pred_fallthru
        _
      %p105 = scmp.le.s32.totalorder 1, %s13
      %p106 = scmp.lt.s32.totalorder %s13, 3
      %p107 = pnand %p105, %p106
      %p108 = pneg %p107
      // Predicated region
      $region21: #{tpu_custom_call.1} parent=5 // pred_check
        _
      $region22: #{tpu_custom_call.1} parent=5 // pred_check_branch
        %110 = sbr.rel (%p107) target = $region24
      $region23: #{tpu_custom_call.1} parent=5 // pred_region
        %s111 = ssub.s32 %s13, 1
        %s112 = sand.u32 %s26, 1
        %s113 = scalar_lea.sflag [#allocation3], %s112
        %s114 = sand.u32 %s26, 1
        %s115 = smul.addr %s114, 16
        %s116 = scalar_lea.vmem [#allocation2], %s115
        // Predicated region
        $region25: #{tpu_custom_call.1} parent=23 // pred_check
          %p117 = pneg %p39
        $region26: #{tpu_custom_call.1} parent=23 // pred_check_branch
          %119 = sbr.rel (%p117) target = $region28
        $region27: #{tpu_custom_call.1} parent=23 // pred_region
          %120 = dma.done %s113, 256
        $region28: #{tpu_custom_call.1} parent=23 // pred_fallthru
          _
        %s121 = sand.u32 %s26, 1
        %s122 = scalar_lea.sflag [#allocation3], %s121
        %s123 = sand.u32 %s26, 1
        %s124 = smul.addr %s123, 16
        %s125 = scalar_lea.vmem [#allocation2], %s124
        %p126 = pneg %p39
        %p127 = pneg %p36
        %p128 = pneg %p65
        %p129 = pneg %p62
        %s130 = sand.u32 %s52, 1
        %s131 = scalar_lea.sflag [#allocation4], %s130
        %s132 = sand.u32 %s52, 1
        %s133 = smul.addr %s132, 16
        %s134 = scalar_lea.vmem [#allocation5], %s133
        %v135 = vld [vmem:[%s116] sm:$0xff]
        %v136 = vld [vmem:[%s116 + $0x8] sm:$0xff]
        %v137 = vrot.slane %v135, 7
        %v138 = vrot.slane %v136, 7
        %v139 = vlaneseq
        %v140 = vshrl.u32 %v139, 7
        %vm141 = vcmp.lt.s32.totalorder %v140, 1
        %v142 = vsel %vm141, %v137, %v138
        %v143 = vsel %vm141, %v138, %v137
        %v144 = vrot.slane %v135, 1
        %v145 = vrot.slane %v136, 1
        %vm146 = vcmp.lt.s32.totalorder %v140, 7
        %v147 = vsel %vm146, %v144, %v145
        %v148 = vsel %vm146, %v145, %v144
        %vm149 = vcmask 1047680
        %150 = vrot.lane.b32.xlu0 %v135, 16
        %v151 = vpop.permute.xlu0 %150
        %v152 = vsel %vm149, %v151, %v135
        %153 = vrot.lane.b32.xlu0 %v136, 16
        %v154 = vpop.permute.xlu0 %153
        %v155 = vsel %vm149, %v154, %v136
        %156 = vrot.lane.b32.xlu0 %v152, 16
        %v157 = vpop.permute.xlu0 %156
        %158 = vrot.lane.b32.xlu0 %v155, 16
        %v159 = vpop.permute.xlu0 %158
        %v160 = vsel %vm149, %v157, %v135
        %v161 = vsel %vm149, %v159, %v136
        %v162 = vmul.f32 %v135, 5.0
        %v163 = vmul.f32 %v136, 5.0
        %v164 = vadd.f32 %v143, %v147
        %v165 = vadd.f32 %v142, %v148
        %168 = vrot.lane.b32.xlu0 %v160, 113
        %v169 = vpop.permute.xlu0 %168
        %170 = vrot.lane.b32.xlu0 %v161, 113
        %v171 = vpop.permute.xlu0 %170
        %v174 = vadd.f32 %v164, %v169
        %v175 = vadd.f32 %v165, %v171
        %176 = vrot.lane.b32.xlu0 %v160, 127
        %v177 = vpop.permute.xlu0 %176
        %178 = vrot.lane.b32.xlu0 %v161, 127
        %v179 = vpop.permute.xlu0 %178
        %v182 = vadd.f32 %v174, %v177
        %v183 = vadd.f32 %v175, %v179
        %v184 = vsub.f32 %v162, %v182
        %v185 = vsub.f32 %v163, %v183
        %vm186 = vcmask 130048
        %187 = vst.msk [vmem:[%s134] sm:$0xff] %vm186, %v184
        %188 = vst.msk [vmem:[%s134 + $0x8] sm:$0xff] %vm186, %v185
        %v189 = vld [vmem:[%s134] sm:$0x1]
        %v190 = vld [vmem:[%s116 + $0xf] sm:$0x1]
        %v191 = vadd.f32 %v189, %v190
        %vm192 = vcmask 122880
        %193 = vst.msk [vmem:[%s134] sm:$0x1] %vm192, %v191
        %v194 = vld [vmem:[%s134 + $0xf] sm:$0x1]
        %v195 = vld [vmem:[%s116] sm:$0x1]
        %v196 = vadd.f32 %v194, %v195
        %197 = vst.msk [vmem:[%s134 + $0xf] sm:$0x1] %vm192, %v196
        %v198 = vld [vmem:[%s134] sm:$0xff]
        %v199 = vld [vmem:[%s134 + $0x8] sm:$0xff]
        %v200 = vld [vmem:[%s116] sm:$0xff]
        %v201 = vld [vmem:[%s116 + $0x8] sm:$0xff]
        %204 = vrot.lane.b32.xlu0 %v200, 113
        %v205 = vpop.permute.xlu0 %204
        %206 = vrot.lane.b32.xlu0 %v201, 113
        %v207 = vpop.permute.xlu0 %206
        %v210 = vadd.f32 %v198, %v205
        %v211 = vadd.f32 %v199, %v207
        %vm212 = vcmask 7168
        %213 = vst.msk [vmem:[%s134] sm:$0xff] %vm212, %v210
        %214 = vst.msk [vmem:[%s134 + $0x8] sm:$0xff] %vm212, %v211
        %v215 = vld [vmem:[%s134] sm:$0xff]
        %v216 = vld [vmem:[%s134 + $0x8] sm:$0xff]
        %v217 = vld [vmem:[%s116] sm:$0xff]
        %v218 = vld [vmem:[%s116 + $0x8] sm:$0xff]
        %221 = vrot.lane.b32.xlu0 %v217, 15
        %v222 = vpop.permute.xlu0 %221
        %223 = vrot.lane.b32.xlu0 %v218, 15
        %v224 = vpop.permute.xlu0 %223
        %v227 = vadd.f32 %v215, %v222
        %v228 = vadd.f32 %v216, %v224
        %vm229 = vcmask 130168
        %230 = vst.msk [vmem:[%s134] sm:$0xff] %vm229, %v227
        %231 = vst.msk [vmem:[%s134 + $0x8] sm:$0xff] %vm229, %v228
        %s232 = sand.u32 %s52, 1
        %s233 = scalar_lea.sflag [#allocation4], %s232
        %s234 = sand.u32 %s52, 1
        %s235 = smul.addr %s234, 16
        %s236 = scalar_lea.vmem [#allocation5], %s235
        // Predicated region
        $region29: #{tpu_custom_call.1} parent=23 // pred_check
          %p237 = pneg %p62
        $region30: #{tpu_custom_call.1} parent=23 // pred_check_branch
          %239 = sbr.rel (%p237) target = $region32
        $region31: #{tpu_custom_call.1} parent=23 // pred_region
          %s241 = ssub.s32 256, 256
          %242 = vsyncadd %s233, %s241
          %s243 = smul.addr %s18, 2
          %s244 = smul.addr %s243, 128
          %s245 = scalar_lea.hbm %s1, %s244
          %s246 = sshll.u32 %s236, 4
          %s247 = int_to_ptr.vmem [resolvable:$true] %s246
          %252 = dma.vmem_to_hbm [thread:$0]  %s247, 256, %s245, %s233, 128, 128, 8
        $region32: #{tpu_custom_call.1} parent=23 // pred_fallthru
          _
      $region24: #{tpu_custom_call.1} parent=5 // pred_fallthru
        _
      %p253 = scmp.le.s32.totalorder 2, %s13
      // Predicated region
      $region33: #{tpu_custom_call.1} parent=5 // pred_check
        %p254 = pneg %p253
      $region34: #{tpu_custom_call.1} parent=5 // pred_check_branch
        %256 = sbr.rel (%p254) target = $region36
      $region35: #{tpu_custom_call.1} parent=5 // pred_region
        %s257 = ssub.s32 %s13, 2
        // Predicated region
        $region37: #{tpu_custom_call.1} parent=35 // pred_check
          %p258 = pneg %p68
        $region38: #{tpu_custom_call.1} parent=35 // pred_check_branch
          %260 = sbr.rel (%p258) target = $region40
        $region39: #{tpu_custom_call.1} parent=35 // pred_region
          %s261 = sand.u32 %s53, 1
          %s262 = scalar_lea.sflag [#allocation4], %s261
          %s263 = sand.u32 %s53, 1
          %s264 = smul.addr %s263, 16
          %s265 = scalar_lea.vmem [#allocation5], %s264
          %266 = dma.done %s262, 256
        $region40: #{tpu_custom_call.1} parent=35 // pred_fallthru
          _
      $region36: #{tpu_custom_call.1} parent=5 // pred_fallthru
        _
    $region6: #{tpu_custom_call.1} parent=1 // loop_footer
      %s17 = sadd.s32 1, %s13
    $region7: #{tpu_custom_call.1} parent=1 // loop_footer_branch
      %12 = sbr.rel target = $region3
    $region8: #{tpu_custom_call.1} parent=1 // loop_exit
      _
    %267 = vsyncpa [#allocation3], 1
    %s268 = scalar_lea.sflag [#allocation3], 1
    %269 = vsyncpa %s268, 1
    %270 = vsyncpa [#allocation4], 1
    %s271 = scalar_lea.sflag [#allocation4], 1
    %272 = vsyncpa %s271, 1

</llo_original>
